<compile_context>
chip_gen: v7x
topology: tpu7x:2x2x1
jax: 0.10.0
libtpu: 0.0.40
codegen_flags: <defaults>
</compile_context>

<pallas_src>
import functools

import jax
import jax.numpy as jnp
from jax.experimental import pallas as pl
from jax.experimental.pallas import tpu as pltpu


# -----------------------------------------------------------------------------
# Kernel 1: VFE (PillarVFE PFN layer) — per-point linear + bias + ReLU.
#
# Layout trick: 4 points are packed per row, so the input block is (T, 4*Fin)
# and the output block is (T, 4*C) = (T, 128)  ->  fully lane-dense stores and
# 4x denser loads.  The weight becomes a small block-diagonal (4*Fin, 4*C)
# matrix built once in the wrapper; this is pure layout plumbing, the math is
# identical to (N, Fin) @ (Fin, C).
# -----------------------------------------------------------------------------
def _vfe_kernel(x_ref, w_ref, b_ref, o_ref):
    y = jnp.dot(x_ref[...], w_ref[...], preferred_element_type=jnp.float32)
    o_ref[...] = jnp.maximum(y + b_ref[...], 0.0)


def vfe_forward(point_feats, vfe_w, vfe_b, *, pack=4, tile_rows=512):
    """point_feats: (N, Fin) f32 -> (N, C) f32  (linear + bias + ReLU)."""
    n, fin = point_feats.shape
    c = vfe_w.shape[1]

    # Pack `pack` points per row, pad N so packed rows tile evenly.
    rows = -(-n // pack)
    tile_rows = min(tile_rows, max(8, ((rows + 7) // 8) * 8))
    rows_p = -(-rows // tile_rows) * tile_rows
    n_pad = rows_p * pack
    feats_p = jnp.zeros((n_pad, fin), jnp.float32).at[:n].set(point_feats)
    x_packed = feats_p.reshape(rows_p, pack * fin)   # free row-major view

    # Block-diagonal weight / tiled bias (tiny, built once).
    w_bd = jnp.zeros((pack * fin, pack * c), jnp.float32)
    for p in range(pack):
        w_bd = w_bd.at[p * fin:(p + 1) * fin, p * c:(p + 1) * c].set(vfe_w)
    b_tiled = jnp.tile(vfe_b.reshape(1, c), (1, pack))   # (1, pack*c)

    out_packed = pl.pallas_call(
        _vfe_kernel,
        out_shape=jax.ShapeDtypeStruct((rows_p, pack * c), jnp.float32),
        grid=(rows_p // tile_rows,),
        in_specs=[
            pl.BlockSpec((tile_rows, pack * fin), lambda i: (i, 0)),
            pl.BlockSpec((pack * fin, pack * c), lambda i: (0, 0)),
            pl.BlockSpec((1, pack * c), lambda i: (0, 0)),
        ],
        out_specs=pl.BlockSpec((tile_rows, pack * c), lambda i: (i, 0)),
        compiler_params=pltpu.CompilerParams(
            dimension_semantics=("parallel",),
            vmem_limit_bytes=48 * 1024 * 1024),
    )(x_packed, w_bd, b_tiled)

    return out_packed.reshape(n_pad, c)[:n]   # drop padded rows


# -----------------------------------------------------------------------------
# Kernel 2: backbone_2d — 3x3 conv (stride 1, 'same') + fused BN + ReLU.
#
# Grid = (batch, H // tile_h), both parallel.  The padded input stays in HBM
# (memory_space=pl.ANY); each grid step DMAs its (tile_h+2)-row halo window
# into a VMEM scratch, builds an im2col matrix and does ONE K = 9*Cin bf16
# matmul on the MXU (f32 accumulation), then applies BN + ReLU and writes a
# lane-dense (tile_h, W*Cout) output block.
# -----------------------------------------------------------------------------
def _conv_bn_relu_kernel(xp_hbm, w_ref, scale_ref, shift_ref, o_ref, xslab,
                         *, tile_h, W, Cin, Cout):
    b = pl.program_id(0)
    i = pl.program_id(1)
    row0 = pl.multiple_of(i * tile_h, tile_h)
    # Manual halo fetch: rows [i*tile_h, i*tile_h + tile_h + 2) of padded map.
    pltpu.sync_copy(xp_hbm.at[b, pl.ds(row0, tile_h + 2), :, :], xslab)

    x = xslab[...]                                    # (tile_h+2, W+2, Cin) bf16
    # im2col: one K = 9*Cin contraction instead of 9 K=Cin matmuls.
    cols = []
    for dy in range(3):
        for dx in range(3):
            cols.append(x[dy:dy + tile_h, dx:dx + W, :].reshape(tile_h * W, Cin))
    patches = jnp.concatenate(cols, axis=-1)          # (tile_h*W, 9*Cin) bf16
    acc = jnp.dot(patches, w_ref[...], preferred_element_type=jnp.float32)
    y = acc * scale_ref[...] + shift_ref[...]         # fused BatchNorm (f32)
    y = jnp.maximum(y, 0.0)                           # ReLU
    # Lane-dense store: last dim W*Cout (>= 128) -> unmasked vst.
    o_ref[0] = y.reshape(tile_h, W * Cout)


def backbone2d_forward(bev, conv_w, bn_scale, bn_shift, *, tile_h=8):
    B, H, W, Cin = bev.shape
    Cout = conv_w.shape[-1]
    tile_h = min(tile_h, H)
    assert H % tile_h == 0, "H must be divisible by tile_h"

    # bf16 activations / weights on the MXU; accumulation stays f32.
    x_bf = bev.astype(jnp.bfloat16)
    # TODO(synk): for production-size BEV maps, fuse this 1-px pad into the
    # kernel's manual DMA (boundary-masked copies) to avoid an extra HBM pass.
    xp = jnp.pad(x_bf, ((0, 0), (1, 1), (1, 1), (0, 0)))   # (B, H+2, W+2, Cin)
    w_flat = conv_w.reshape(9 * Cin, Cout).astype(jnp.bfloat16)

    kern = functools.partial(_conv_bn_relu_kernel,
                             tile_h=tile_h, W=W, Cin=Cin, Cout=Cout)
    out = pl.pallas_call(
        kern,
        out_shape=jax.ShapeDtypeStruct((B, H, W * Cout), jnp.float32),
        grid=(B, H // tile_h),
        in_specs=[
            pl.BlockSpec(memory_space=pl.ANY),                  # padded input (HBM)
            pl.BlockSpec((9 * Cin, Cout), lambda b, i: (0, 0)),
            pl.BlockSpec((1, Cout), lambda b, i: (0, 0)),
            pl.BlockSpec((1, Cout), lambda b, i: (0, 0)),
        ],
        out_specs=pl.BlockSpec((1, tile_h, W * Cout), lambda b, i: (b, i, 0)),
        scratch_shapes=[pltpu.VMEM((tile_h + 2, W + 2, Cin), jnp.bfloat16)],
        compiler_params=pltpu.CompilerParams(
            dimension_semantics=("parallel", "parallel"),
            vmem_limit_bytes=48 * 1024 * 1024),
    )(xp, w_flat, bn_scale, bn_shift)
    return out.reshape(B, H, W, Cout)


# -----------------------------------------------------------------------------
# map_to_bev: pillar scatter (max over points per pillar).
# -----------------------------------------------------------------------------
def map_to_bev(points, point_feats, *, batch_size, grid_hw, pc_range):
    # TODO(synk): data-dependent scatter-max has no clean Pallas TPU equivalent;
    # for production point counts sort by (batch, pillar) outside and use a
    # scalar-prefetch segment-max Pallas kernel fused with the VFE matmul.
    H, W = grid_hw
    xmin, ymin, zmin, xmax, ymax, zmax = pc_range
    vx = (xmax - xmin) / W
    vy = (ymax - ymin) / H

    b_idx = points[:, 0].astype(jnp.int32)
    x, y, z = points[:, 1], points[:, 2], points[:, 3]
    px = jnp.floor((x - xmin) / vx).astype(jnp.int32)
    py = jnp.floor((y - ymin) / vy).astype(jnp.int32)
    valid = ((px >= 0) & (px < W) & (py >= 0) & (py < H) &
             (z >= zmin) & (z <= zmax) &
             (b_idx >= 0) & (b_idx < batch_size))

    # Invalid points get an out-of-bounds batch index -> dropped by the scatter
    # (mode='drop'); their features are zeroed too for extra safety.
    b_safe = jnp.where(valid, b_idx, batch_size)
    px = jnp.clip(px, 0, W - 1)
    py = jnp.clip(py, 0, H - 1)
    feats = jnp.where(valid[:, None], point_feats, 0.0)

    bev = jnp.zeros((batch_size, H, W, point_feats.shape[-1]), jnp.float32)
    bev = bev.at[b_safe, py, px].max(feats, mode="drop")
    return bev


# -----------------------------------------------------------------------------
# BEVMaker forward (maker_type='early').
# -----------------------------------------------------------------------------
def bev_maker_forward(batch_dict, params, *, batch_size, grid_hw, pc_range):
    points = batch_dict["points"]          # [N, 6] = (b, x, y, z, intensity, agent)
    point_feats = points[:, 1:5]           # (x, y, z, intensity)

    # VFE: per-point PFN (linear + bias + ReLU) — Pallas matmul kernel.
    pfeat = vfe_forward(point_feats, params["vfe_w"], params["vfe_b"])

    # map_to_bev: pillar scatter-max (plain JAX glue).
    bev = map_to_bev(points, pfeat, batch_size=batch_size,
                     grid_hw=grid_hw, pc_range=pc_range)

    # backbone_2d: 3x3 conv + fused BN + ReLU — Pallas conv kernel.
    spatial_features_2d = backbone2d_forward(
        bev, params["conv_w"], params["bn_scale"], params["bn_shift"], tile_h=8)

    batch_dict["bev_img_early"] = spatial_features_2d
    return batch_dict


def make_params(fin, c_vfe, c_out):
    """Deterministic synthetic parameter init (no checkpoint load)."""
    kw, kb, kc = jax.random.split(jax.random.PRNGKey(42), 3)
    vfe_w = 0.1 * jax.random.normal(kw, (fin, c_vfe), jnp.float32)
    vfe_b = 0.01 * jax.random.normal(kb, (1, c_vfe), jnp.float32)
    conv_w = 0.05 * jax.random.normal(kc, (3, 3, c_vfe, c_out), jnp.float32)  # HWIO
    # BatchNorm (eval mode) folded: gamma=1, beta=0, mean=0, var=1.
    eps = 1e-5
    gamma = jnp.ones((1, c_out), jnp.float32)
    beta = jnp.zeros((1, c_out), jnp.float32)
    mean = jnp.zeros((1, c_out), jnp.float32)
    var = jnp.ones((1, c_out), jnp.float32)
    bn_scale = gamma / jnp.sqrt(var + eps)
    bn_shift = beta - mean * bn_scale
    return dict(vfe_w=vfe_w, vfe_b=vfe_b, conv_w=conv_w,
                bn_scale=bn_scale, bn_shift=bn_shift)


if __name__ == "__main__":
    B, N = 2, 256
    FIN, C_VFE, C_OUT = 4, 32, 32
    H = W = 16
    PC_RANGE = (-51.2, -51.2, -8.0, 51.2, 51.2, 0.0)

    key = jax.random.PRNGKey(0)
    k1, k2, k3 = jax.random.split(key, 3)
    xyz = jax.random.uniform(k1, (N, 3), jnp.float32, minval=-51.2, maxval=51.2)
    xyz = xyz.at[:, 2].set(jax.random.uniform(k3, (N,), jnp.float32, -8.0, 0.0))
    intensity = jax.random.uniform(k2, (N, 1), jnp.float32)
    batch_idx = (jnp.arange(N) % B).astype(jnp.float32)[:, None]
    agent_idx = jnp.zeros((N, 1), jnp.float32)
    points = jnp.concatenate([batch_idx, xyz, intensity, agent_idx], axis=1)

    params = make_params(FIN, C_VFE, C_OUT)
    batch_dict = {"points": points}

    out = bev_maker_forward(batch_dict, params, batch_size=B,
                            grid_hw=(H, W), pc_range=PC_RANGE)
    sf2d = jax.block_until_ready(out["bev_img_early"])
    assert sf2d.shape == (B, H, W, C_OUT)
    assert bool(jnp.all(jnp.isfinite(sf2d)))

    # --- numerical sanity check against a plain-JAX reference --------------
    pfeat = vfe_forward(points[:, 1:5], params["vfe_w"], params["vfe_b"])
    pfeat_ref = jnp.maximum(points[:, 1:5] @ params["vfe_w"] + params["vfe_b"], 0.0)
    tol_vfe = 1e-2 * (1.0 + float(jnp.max(jnp.abs(pfeat_ref))))
    assert float(jnp.max(jnp.abs(pfeat - pfeat_ref))) < tol_vfe

    bev = map_to_bev(points, pfeat, batch_size=B, grid_hw=(H, W), pc_range=PC_RANGE)
    x_bf = bev.astype(jnp.bfloat16).astype(jnp.float32)
    xpad = jnp.pad(x_bf, ((0, 0), (1, 1), (1, 1), (0, 0)))
    w_bf = params["conv_w"].astype(jnp.bfloat16).astype(jnp.float32)
    ref = jnp.zeros((B, H, W, C_OUT), jnp.float32)
    for dy in range(3):
        for dx in range(3):
            ref = ref + jnp.einsum("bhwc,cd->bhwd",
                                   xpad[:, dy:dy + H, dx:dx + W, :], w_bf[dy, dx])
    ref = ref * params["bn_scale"].reshape(1, 1, 1, -1) \
              + params["bn_shift"].reshape(1, 1, 1, -1)
    ref = jnp.maximum(ref, 0.0)
    tol_conv = 1e-2 * (1.0 + float(jnp.max(jnp.abs(ref))))
    assert float(jnp.max(jnp.abs(sf2d - ref))) < tol_conv

    print("KERNEL_OK")
</pallas_src>

<mosaic_0001>
module attributes {stable_mosaic.version = 11 : i64} {
  func.func @_vfe_kernel(%arg0: i32, %arg1: memref<64x16xf32, #tpu.memory_space<vmem>>, %arg2: memref<16x128xf32, #tpu.memory_space<vmem>>, %arg3: memref<1x128xf32, #tpu.memory_space<vmem>>, %arg4: memref<64x128xf32, #tpu.memory_space<vmem>>) attributes {dimension_semantics = [#tpu.dimension_semantics<parallel>], iteration_bounds = array<i64: 1>, scalar_prefetch = 0 : i64, scratch_operands = 0 : i64, tpu.core_type = #tpu.core_type<tc>, window_params = [{transform_indices = @transform_0, window_bounds = array<i64: 64, 16>}, {pipeline_mode = #tpu.pipeline_mode<synchronous>, transform_indices = @transform_1, window_bounds = array<i64: 16, 128>}, {pipeline_mode = #tpu.pipeline_mode<synchronous>, transform_indices = @transform_2, window_bounds = array<i64: 1, 128>}, {transform_indices = @transform_3, window_bounds = array<i64: 64, 128>}]} {
    %c0 = arith.constant 0 : index
    %c0_0 = arith.constant 0 : index
    %0 = vector.load %arg1[%c0, %c0_0] : memref<64x16xf32, #tpu.memory_space<vmem>>, vector<64x16xf32>
    %c0_1 = arith.constant 0 : index
    %c0_2 = arith.constant 0 : index
    %1 = vector.load %arg2[%c0_1, %c0_2] : memref<16x128xf32, #tpu.memory_space<vmem>>, vector<16x128xf32>
    %cst = arith.constant dense<0.000000e+00> : vector<64x128xf32>
    %2 = tpu.matmul %0, %1, %cst {dimension_numbers = #tpu.dot_dimension_numbers<[1], [0], [0], [1], [0, 0, 1, 1], [], []>} : vector<64x16xf32>, vector<16x128xf32>, vector<64x128xf32> -> vector<64x128xf32>
    %c0_3 = arith.constant 0 : index
    %c0_4 = arith.constant 0 : index
    %3 = vector.load %arg3[%c0_3, %c0_4] : memref<1x128xf32, #tpu.memory_space<vmem>>, vector<1x128xf32>
    %4 = vector.broadcast %3 : vector<1x128xf32> to vector<64x128xf32>
    %5 = arith.addf %2, %4 : vector<64x128xf32>
    %cst_5 = arith.constant 0.000000e+00 : f32
    %6 = vector.broadcast %cst_5 : f32 to vector<64x128xf32>
    %7 = arith.maximumf %5, %6 : vector<64x128xf32>
    %c0_6 = arith.constant 0 : index
    %c0_7 = arith.constant 0 : index
    %8 = vector.load %arg4[%c0_6, %c0_7] : memref<64x128xf32, #tpu.memory_space<vmem>>, vector<64x128xf32>
    tpu.vector_store %arg4[%c0_6, %c0_7], %7 {strides = array<i32>} : memref<64x128xf32, #tpu.memory_space<vmem>>, vector<64x128xf32>,
    return
  }
  func.func @transform_0(%arg0: i32) -> (i32, i32) {
    %c0_i32 = arith.constant 0 : i32
    %c0_i32_0 = arith.constant 0 : i32
    return %arg0, %c0_i32 : i32, i32
  }
  func.func @transform_1(%arg0: i32) -> (i32, i32) {
    %c0_i32 = arith.constant 0 : i32
    %c0_i32_0 = arith.constant 0 : i32
    %c0_i32_1 = arith.constant 0 : i32
    return %c0_i32, %c0_i32_0 : i32, i32
  }
  func.func @transform_2(%arg0: i32) -> (i32, i32) {
    %c0_i32 = arith.constant 0 : i32
    %c0_i32_0 = arith.constant 0 : i32
    %c0_i32_1 = arith.constant 0 : i32
    return %c0_i32, %c0_i32_0 : i32, i32
  }
  func.func @transform_3(%arg0: i32) -> (i32, i32) {
    %c0_i32 = arith.constant 0 : i32
    %c0_i32_0 = arith.constant 0 : i32
    return %arg0, %c0_i32 : i32, i32
  }
}

</mosaic_0001>

<llo_original>
// kernel: tpu_custom_call.1
$region0: #{tpu_custom_call.1}
  #allocation0 [shape = 'u32[]', space=smem, size = 0x4, offset = 0x4, fixed_abs, tag = 'smem constant byte address 0x4 - core index']
  #allocation1 [shape = 'u32[144,128]{1,0:T(1,128)}', space=vmem, size = 0x12000, scoped, tag = 'internal scratch']
  %s0 = inlined_call_operand.vmem [shape: f32[64,16], index: 0, kind: input, shape index: {}]
  %s1 = inlined_call_operand.vmem [shape: f32[16,128], index: 1, kind: input, shape index: {}]
  %s2 = inlined_call_operand.vmem [shape: f32[1,128], index: 2, kind: input, shape index: {}]
  %s3 = inlined_call_operand.hbm [shape: f32[64,128], index: 3, kind: output, shape index: {}]
  %s4 = sld [smem:[#allocation0]]
  $region22: #{tpu_custom_call.1} parent=0
    _
  %s6 = ssub.s32 1, %s4
  %s7 = scalar_select 0, %s6, %s4
  $region1: #{tpu_custom_call.1} parent=0
    #allocation2 [shape = 'u8[32768]{0}', space=vmem, size = 0x8000, scoped, tag = 'output window, operand 0, single buffered']
    #allocation3 [shape = 's32[1]{0}', space=sflag, size = 0x4, scoped, tag = 'scoped memory for tpu_custom_call.1']
    %8 = vsyncpa [#allocation3], 0
    // Predicated region
    $region2: #{tpu_custom_call.1} parent=1 // pred_check
      _
    $region3: #{tpu_custom_call.1} parent=1 // pred_check_branch
      %10 = sbr.rel (0) target = $region5
    $region4: #{tpu_custom_call.1} parent=1 // pred_region
      _
    $region5: #{tpu_custom_call.1} parent=1 // pred_fallthru
      _
    // Predicated region
    $region6: #{tpu_custom_call.1} parent=1 // pred_check
      _
    $region7: #{tpu_custom_call.1} parent=1 // pred_check_branch
      %12 = sbr.rel (0) target = $region9
    $region8: #{tpu_custom_call.1} parent=1 // pred_region
      _
    $region9: #{tpu_custom_call.1} parent=1 // pred_fallthru
      _
    // Predicated region
    $region10: #{tpu_custom_call.1} parent=1 // pred_check
      _
    $region11: #{tpu_custom_call.1} parent=1 // pred_check_branch
      %14 = sbr.rel (0) target = $region13
    $region12: #{tpu_custom_call.1} parent=1 // pred_region
      _
    $region13: #{tpu_custom_call.1} parent=1 // pred_fallthru
      _
    %v15 = vld [vmem:[%s0] sm:$0xff]
    %v16 = vld [vmem:[%s0 + $0x8] sm:$0xff]
    %v17 = vld [vmem:[%s0 + $0x10] sm:$0xff]
    %v18 = vld [vmem:[%s0 + $0x18] sm:$0xff]
    %v19 = vld [vmem:[%s0 + $0x20] sm:$0xff]
    %v20 = vld [vmem:[%s0 + $0x28] sm:$0xff]
    %v21 = vld [vmem:[%s0 + $0x30] sm:$0xff]
    %v22 = vld [vmem:[%s0 + $0x38] sm:$0xff]
    %v23 = vld [vmem:[%s1] sm:$0xff]
    %v24 = vld [vmem:[%s1 + $0x8] sm:$0xff]
    %v25 = vld [vmem:[%s2] sm:$0x1]
    %v27 = vlaneseq
    %v28 = vshrl.u32 %v27, 7
    %v29 = vsub.s32 0, %v28
    %v30 = vrot.slane %v25, %v29
    %vm32 = vcmask 130048
    %v34 = vsel %vm32, %v15, 0
    %v37 = vsel %vm32, %v16, 0
    %v40 = vsel %vm32, %v17, 0
    %v43 = vsel %vm32, %v18, 0
    %v46 = vsel %vm32, %v19, 0
    %v49 = vsel %vm32, %v20, 0
    %v52 = vsel %vm32, %v21, 0
    %v55 = vsel %vm32, %v22, 0
    %57 = vmatprep.subr.mxu0 0.0
    %58 = vmatpush1.msra.mxu0 %v23
    %59 = vmatprep.subr.mxu0 0.0
    %60 = vmatpush1.msra.mxu0 %v24
    %61 = vmatprep.subr.mxu0 0.0
    %62 = vmatpush1.msra.mxu0 0.0
    %63 = vmatprep.subr.mxu0 0.0
    %64 = vmatpush1.msra.mxu0 0.0
    %65 = vmatprep.subr.mxu0 0.0
    %66 = vmatpush1.msra.mxu0 0.0
    %67 = vmatprep.subr.mxu0 0.0
    %68 = vmatpush1.msra.mxu0 0.0
    %69 = vmatprep.subr.mxu0 0.0
    %70 = vmatpush1.msra.mxu0 0.0
    %71 = vmatprep.subr.mxu0 0.0
    %72 = vmatpush1.msra.mxu0 0.0
    %73 = vmatprep.subr.mxu0 0.0
    %74 = vmatpush1.msra.mxu0 0.0
    %75 = vmatprep.subr.mxu0 0.0
    %76 = vmatpush1.msra.mxu0 0.0
    %77 = vmatprep.subr.mxu0 0.0
    %78 = vmatpush1.msra.mxu0 0.0
    %79 = vmatprep.subr.mxu0 0.0
    %80 = vmatpush1.msra.mxu0 0.0
    %81 = vmatprep.subr.mxu0 0.0
    %82 = vmatpush1.msra.mxu0 0.0
    %83 = vmatprep.subr.mxu0 0.0
    %84 = vmatpush1.msra.mxu0 0.0
    %85 = vmatprep.subr.mxu0 0.0
    %86 = vmatpush1.msra.mxu0 0.0
    %87 = vmatprep.subr.mxu0 0.0
    %88 = vmatpush1.msra.mxu0 0.0
    %89 = vmatprep.subr.mxu0 0.0
    %90 = vmatpush1.msra.mxu0 0.0
    %91 = vmatprep.subr.mxu0 0.0
    %92 = vmatpush1.msra.mxu0 0.0
    %93 = vmatprep.subr.mxu0 0.0
    %94 = vmatpush1.msra.mxu0 0.0
    %95 = vmatprep.subr.mxu0 0.0
    %96 = vmatpush1.msra.mxu0 0.0
    %97 = vmatprep.subr.mxu0 0.0
    %98 = vmatpush1.msra.mxu0 0.0
    %99 = vmatprep.subr.mxu0 0.0
    %100 = vmatpush1.msra.mxu0 0.0
    %101 = vmatprep.subr.mxu0 0.0
    %102 = vmatpush1.msra.mxu0 0.0
    %103 = vmatprep.subr.mxu0 0.0
    %104 = vmatpush1.msra.mxu0 0.0
    %105 = vmatprep.subr.mxu0 0.0
    %106 = vmatpush1.msra.mxu0 0.0
    %107 = vmatprep.subr.mxu0 0.0
    %108 = vmatpush1.msra.mxu0 0.0
    %109 = vmatprep.subr.mxu0 0.0
    %110 = vmatpush1.msra.mxu0 0.0
    %111 = vmatprep.subr.mxu0 0.0
    %112 = vmatpush1.msra.mxu0 0.0
    %113 = vmatprep.subr.mxu0 0.0
    %114 = vmatpush1.msra.mxu0 0.0
    %115 = vmatprep.subr.mxu0 0.0
    %116 = vmatpush1.msra.mxu0 0.0
    %117 = vmatprep.subr.mxu0 0.0
    %118 = vmatpush1.msra.mxu0 0.0
    %119 = vmatprep.subr.mxu0 0.0
    %120 = vmatpush1.msra.mxu0 0.0
    %121 = vmatprep.mubr.f32.mxu0 0.0
    %122 = vmatmul.mubr.f32.gmra.mrb[0].mxu0 %v34
    %v123 = vpop.f32.mrb[0].mxu0
    %v124 = vadd.f32 %v30, %v123
    %v125 = vpop.f32.mrb[0].mxu0
    %126 = vmatprep.mubr.f32.mxu0 0.0
    %127 = vmatmul.mubr.f32.gmra.mrb[0].mxu0 %v37
    %v128 = vpop.f32.mrb[0].mxu0
    %v129 = vadd.f32 %v30, %v128
    %v130 = vpop.f32.mrb[0].mxu0
    %131 = vmatprep.mubr.f32.mxu0 0.0
    %132 = vmatmul.mubr.f32.gmra.mrb[0].mxu0 %v40
    %v133 = vpop.f32.mrb[0].mxu0
    %v134 = vadd.f32 %v30, %v133
    %v135 = vpop.f32.mrb[0].mxu0
    %136 = vmatprep.mubr.f32.mxu0 0.0
    %137 = vmatmul.mubr.f32.gmra.mrb[0].mxu0 %v43
    %v138 = vpop.f32.mrb[0].mxu0
    %v139 = vadd.f32 %v30, %v138
    %v140 = vpop.f32.mrb[0].mxu0
    %141 = vmatprep.mubr.f32.mxu0 0.0
    %142 = vmatmul.mubr.f32.gmra.mrb[0].mxu0 %v46
    %v143 = vpop.f32.mrb[0].mxu0
    %v144 = vadd.f32 %v30, %v143
    %v145 = vpop.f32.mrb[0].mxu0
    %146 = vmatprep.mubr.f32.mxu0 0.0
    %147 = vmatmul.mubr.f32.gmra.mrb[0].mxu0 %v49
    %v148 = vpop.f32.mrb[0].mxu0
    %v149 = vadd.f32 %v30, %v148
    %v150 = vpop.f32.mrb[0].mxu0
    %151 = vmatprep.mubr.f32.mxu0 0.0
    %152 = vmatmul.mubr.f32.gmra.mrb[0].mxu0 %v52
    %v153 = vpop.f32.mrb[0].mxu0
    %v154 = vadd.f32 %v30, %v153
    %v155 = vpop.f32.mrb[0].mxu0
    %156 = vmatprep.mubr.f32.mxu0 0.0
    %157 = vmatmul.mubr.f32.gmra.mrb[0].mxu0 %v55
    %v158 = vpop.f32.mrb[0].mxu0
    %v159 = vadd.f32 %v30, %v158
    %v160 = vpop.f32.mrb[0].mxu0
    %161 = vdwg.mxu0
    %v162 = vmax.f32 %v124, 0.0
    %v163 = vmax.f32 %v129, 0.0
    %v164 = vmax.f32 %v134, 0.0
    %v165 = vmax.f32 %v139, 0.0
    %v166 = vmax.f32 %v144, 0.0
    %v167 = vmax.f32 %v149, 0.0
    %v168 = vmax.f32 %v154, 0.0
    %v169 = vmax.f32 %v159, 0.0
    %170 = vst [vmem:[#allocation2] sm:$0xff] %v162
    %171 = vst [vmem:[#allocation2 + $0x8] sm:$0xff] %v163
    %172 = vst [vmem:[#allocation2 + $0x10] sm:$0xff] %v164
    %173 = vst [vmem:[#allocation2 + $0x18] sm:$0xff] %v165
    %174 = vst [vmem:[#allocation2 + $0x20] sm:$0xff] %v166
    %175 = vst [vmem:[#allocation2 + $0x28] sm:$0xff] %v167
    %176 = vst [vmem:[#allocation2 + $0x30] sm:$0xff] %v168
    %177 = vst [vmem:[#allocation2 + $0x38] sm:$0xff] %v169
    // Predicated region
    $region14: #{tpu_custom_call.1} parent=1 // pred_check
      _
    $region15: #{tpu_custom_call.1} parent=1 // pred_check_branch
      %179 = sbr.rel (0) target = $region17
    $region16: #{tpu_custom_call.1} parent=1 // pred_region
      %s181 = ssub.s32 1024, 1024
      %182 = vsyncadd [#allocation3], %s181
      %s183 = sshll.u32 [#allocation2], 4
      %s184 = int_to_ptr.vmem [resolvable:$true] %s183
      %189 = dma.vmem_to_hbm [thread:$0]  %s184, 1024, %s3, [#allocation3], 128, 128, 8
    $region17: #{tpu_custom_call.1} parent=1 // pred_fallthru
      _
    // Predicated region
    $region18: #{tpu_custom_call.1} parent=1 // pred_check
      _
    $region19: #{tpu_custom_call.1} parent=1 // pred_check_branch
      %191 = sbr.rel (0) target = $region21
    $region20: #{tpu_custom_call.1} parent=1 // pred_region
      %192 = dma.done [#allocation3], 1024
    $region21: #{tpu_custom_call.1} parent=1 // pred_fallthru
      _
    %193 = vsyncpa [#allocation3], 1

</llo_original>
